<compile_context>
chip_gen: v5e
topology: v5e:2x2
jax: 0.10.0
libtpu: 0.0.40
codegen_flags: <defaults>
</compile_context>

<pallas_src>
import functools

import jax
import jax.numpy as jnp
from jax.experimental import pallas as pl
from jax.experimental.pallas import tpu as pltpu


def _gat_fused_kernel(x_ref, adj_ref, w1_ref, b1_ref, asrc_ref, adst_ref,
                      ehexp_ref, eden_ref, eout_ref, bmask_ref,
                      w2_ref, b2_ref, a2s_ref, a2d_ref, o_ref,
                      *, num_heads: int, neg_slope: float):
    """Entire GAT forward (all heads + out layer) fused in one kernel."""
    f32 = jnp.float32
    bf16 = jnp.bfloat16
    slope = f32(neg_slope)
    n = x_ref.shape[0]
    H = num_heads

    def leaky(e):
        return jnp.where(e >= 0, e, slope * e)

    def elu(x):
        # ELU(alpha=1); clamp before exp so the unselected branch cannot inf.
        return jnp.where(x > 0, x, jnp.exp(jnp.minimum(x, 0.0)) - 1.0)

    # Adjacency converted ONCE: additive bias (0 / -1e30) + 0/1 multiplier.
    m01 = adj_ref[...].astype(f32)                                   # (n, n)
    bias = (m01 - 1.0) * f32(1e30)                                   # 0 / -1e30

    # ----------------- layer 1: all H heads, lane-packed --------------------
    xw1 = jnp.dot(x_ref[...].astype(bf16), w1_ref[...].astype(bf16),
                  preferred_element_type=f32) + b1_ref[...]          # (n, H*hid)

    # dst scores already expanded to packed lanes by the host-side a_dst_exp
    # packing: d_dst[i, h*n + j] = s_dst[i, h]   (single K=H*hid matmul)
    d_dst = jnp.dot(xw1, adst_ref[...], preferred_element_type=f32)   # (n, H*n)

    # src scores: s_src (n, H) -> packed row r_src[0, h*n + j] = s_src[j, h]
    s_src = jnp.dot(xw1, asrc_ref[...], preferred_element_type=f32)   # (n, H)
    s_src_t = jnp.transpose(s_src)                                    # (H, n)
    r_src = jnp.concatenate([s_src_t[h:h + 1, :] for h in range(H)],
                            axis=1)                                   # (1, H*n)

    bias_p = jnp.concatenate([bias] * H, axis=1)                      # (n, H*n)
    m01_p = jnp.concatenate([m01] * H, axis=1)                        # (n, H*n)

    # packed edge logits: full 128-lane occupancy for leaky / bias add.
    e = leaky(d_dst + r_src) + bias_p                                 # (n, H*n)

    # Per-head masked row max (the only per-head reduce; everything else in
    # the softmax runs once on the packed slab).  Expanded back to packed
    # lanes with a tiny 0/1 indicator matmul (avoids (n,H,n) reshape relayout).
    maxcat = jnp.concatenate(
        [jnp.max(e[:, h * n:(h + 1) * n], axis=-1, keepdims=True)
         for h in range(H)], axis=1)                                  # (n, H)
    e_max = jnp.dot(maxcat, ehexp_ref[...],
                    preferred_element_type=f32)                       # (n, H*n)

    p = jnp.exp(e - e_max) * m01_p                                    # (n, H*n)
    denom = jnp.dot(p, eden_ref[...], preferred_element_type=f32)     # (n, H)

    # Block-diagonal aggregation: one K=H*n MXU pass for all heads.
    xw_bd = (jnp.concatenate([xw1] * H, axis=0)
             * bmask_ref[...]).astype(bf16)                           # (H*n, H*hid)
    agg = jnp.dot(p.astype(bf16), xw_bd, preferred_element_type=f32)  # (n, H*hid)

    inv = pl.reciprocal(jnp.maximum(denom, f32(1e-20)), approx=True)  # (n, H)
    inv_p = jnp.dot(inv, eout_ref[...], preferred_element_type=f32)   # (n, H*hid)
    h_cat = elu(agg * inv_p)                                          # (n, H*hid)

    # ----------------- layer 2: output GATConv (single head) ----------------
    xw2 = jnp.dot(h_cat.astype(bf16), w2_ref[...].astype(bf16),
                  preferred_element_type=f32) + b2_ref[...]           # (n, n_cls)
    xw2_t = jnp.transpose(xw2)                                        # (n_cls, n)
    # score row / column via VPU mult+reduce (no 1-lane slices / dots).
    s2_src_row = jnp.sum(xw2_t * a2s_ref[...], axis=0, keepdims=True)  # (1, n)
    s2_dst_col = jnp.sum(xw2 * a2d_ref[...], axis=-1, keepdims=True)   # (n, 1)

    e2 = leaky(s2_dst_col + s2_src_row) + bias                        # (n, n)
    m2 = jnp.max(e2, axis=-1, keepdims=True)
    p2 = jnp.exp(e2 - m2) * m01                                       # (n, n)
    den2 = jnp.sum(p2, axis=-1, keepdims=True)                        # (n, 1)
    agg2 = jnp.dot(p2.astype(bf16), xw2.astype(bf16),
                   preferred_element_type=f32)                        # (n, n_cls)
    out = agg2 * pl.reciprocal(jnp.maximum(den2, f32(1e-20)), approx=True)
    o_ref[...] = elu(out).astype(o_ref.dtype)                         # is_last=False -> ELU


def gat_forward(params, X, adj, *, neg_slope=0.2):
    """GAT forward (eval: Dropout = identity, use_bn = False) in ONE pallas_call."""
    heads = params["heads"]
    H = len(heads)
    n, c_in = X.shape
    hid = heads[0]["w"].shape[1]
    n_cls = params["out"]["w"].shape[1]
    f32 = jnp.float32

    # ---------- host-side weight / indicator packing (plain XLA) ------------
    w1 = jnp.concatenate([p["w"] for p in heads], axis=1)             # (Cin, H*hid)
    b1 = jnp.concatenate([p["b"] for p in heads], axis=1)             # (1, H*hid)

    a_src_blk = jnp.zeros((H * hid, H), f32)                          # block-diag a_src
    a_dst_exp = jnp.zeros((H * hid, H * n), f32)                      # a_dst pre-expanded
    for h, p in enumerate(heads):
        a_src_blk = a_src_blk.at[h * hid:(h + 1) * hid, h].set(p["a_src"][:, 0])
        a_dst_exp = a_dst_exp.at[h * hid:(h + 1) * hid, h * n:(h + 1) * n].set(
            jnp.broadcast_to(p["a_dst"], (hid, n)))

    head_of_lane = jnp.repeat(jnp.arange(H), n)                       # (H*n,)
    head_of_col = jnp.repeat(jnp.arange(H), hid)                      # (H*hid,)
    e_den = (head_of_lane[:, None] == jnp.arange(H)[None, :]).astype(f32)   # (H*n, H)
    e_hexp = jnp.transpose(e_den)                                            # (H, H*n)
    e_out = (jnp.arange(H)[:, None] == head_of_col[None, :]).astype(f32)     # (H, H*hid)
    blockmask = (head_of_lane[:, None] == head_of_col[None, :]).astype(f32)  # (H*n, H*hid)

    po = params["out"]
    w2, b2 = po["w"], po["b"]
    a2_src_col = po["a_src"]                                          # (n_cls, 1)
    a2_dst_row = jnp.transpose(po["a_dst"])                           # (1, n_cls)

    adj_i8 = (adj != 0).astype(jnp.int8)                              # 4x fewer mask bytes

    operands = (X, adj_i8, w1, b1, a_src_blk, a_dst_exp, e_hexp, e_den, e_out,
                blockmask, w2, b2, a2_src_col, a2_dst_row)

    # Tight, computed scoped-VMEM bound: double-buffered operands + a generous
    # allowance for live (n, H*n) temporaries + compiler scratch headroom.
    out_bytes = n * n_cls * 4
    operand_bytes = sum(int(o.size) * o.dtype.itemsize for o in operands) + out_bytes
    slab_bytes = n * H * n * 4
    vmem_limit = int(2 * operand_bytes + 32 * slab_bytes + (2 << 20))

    flops = int(2 * n * c_in * H * hid                 # theta (all heads)
                + 2 * n * (H * hid) * (H * n)          # dst-score expansion
                + 2 * n * (H * hid) * H                # src scores
                + 2 * n * H * (H * n)                  # max expansion
                + 2 * n * (H * n) * H                  # denominators
                + 2 * n * (H * n) * (H * hid)          # block-diag aggregation
                + 2 * n * H * (H * hid)                # 1/denom expansion
                + 6 * n * H * n                        # packed-slab elementwise
                + 2 * n * (H * hid) * n_cls            # theta (out layer)
                + 4 * n * n_cls + 2 * n * n * n_cls + 6 * n * n)
    transcendentals = int(n * H * n + n * n + n * (H * hid) + n * n_cls + n * H + n)
    bytes_accessed = int(operand_bytes)

    kernel = functools.partial(_gat_fused_kernel, num_heads=H, neg_slope=neg_slope)
    return pl.pallas_call(
        kernel,
        out_shape=jax.ShapeDtypeStruct((n, n_cls), f32),
        # no grid: whole arrays live in VMEM for this single fused invocation.
        compiler_params=pltpu.CompilerParams(vmem_limit_bytes=vmem_limit),
        cost_estimate=pl.CostEstimate(flops=flops,
                                      transcendentals=transcendentals,
                                      bytes_accessed=bytes_accessed),
    )(*operands)


# ---------------------------------------------------------------------------
# Parameter init (deterministic, torch nn.Linear-style uniform bounds)
# ---------------------------------------------------------------------------
def _init_gat_conv(key, c_in, c_out):
    k_w, k_b, k_s, k_d = jax.random.split(key, 4)
    bound = 1.0 / jnp.sqrt(jnp.float32(c_in))
    w = jax.random.uniform(k_w, (c_in, c_out), jnp.float32, -bound, bound)
    b = jax.random.uniform(k_b, (1, c_out), jnp.float32, -bound, bound)
    a_bound = 1.0 / jnp.sqrt(jnp.float32(c_out))
    a_src = jax.random.uniform(k_s, (c_out, 1), jnp.float32, -a_bound, a_bound)
    a_dst = jax.random.uniform(k_d, (c_out, 1), jnp.float32, -a_bound, a_bound)
    return {"w": w, "b": b, "a_src": a_src, "a_dst": a_dst}


def init_gat_params(key, in_channels, hid_channels, num_classes, num_heads):
    keys = jax.random.split(key, num_heads + 1)
    heads = [_init_gat_conv(keys[h], in_channels, hid_channels)
             for h in range(num_heads)]
    out = _init_gat_conv(keys[-1], hid_channels * num_heads, num_classes)
    return {"heads": heads, "out": out}


if __name__ == "__main__":
    N = 32
    in_channels, hid_channels, num_classes, num_heads = 16, 8, 4, 4

    key = jax.random.PRNGKey(0)
    k_x, k_p = jax.random.split(key)

    # input vertex features (N, C_in)
    X = jax.random.normal(k_x, (N, in_channels), jnp.float32)

    # deterministic graph: undirected ring plus "skip-5" chords -> every vertex
    # has at least one neighbor (isolated vertices are also handled safely).
    idx = jnp.arange(N)
    adj = jnp.zeros((N, N), jnp.float32)
    adj = adj.at[idx, (idx + 1) % N].set(1.0)
    adj = adj.at[(idx + 1) % N, idx].set(1.0)
    adj = adj.at[idx, (idx + 5) % N].set(1.0)
    adj = adj.at[(idx + 5) % N, idx].set(1.0)

    params = init_gat_params(k_p, in_channels, hid_channels, num_classes, num_heads)

    out = gat_forward(params, X, adj, neg_slope=0.2)
    out = jax.block_until_ready(out)

    assert out.shape == (N, num_classes), out.shape
    assert bool(jnp.all(jnp.isfinite(out)))
    print("KERNEL_OK")
</pallas_src>

<mosaic_0001>
module attributes {stable_mosaic.version = 11 : i64} {
  func.func @_gat_fused_kernel(%arg0: memref<32x16xf32, #tpu.memory_space<vmem>>, %arg1: memref<32x32xi8, #tpu.memory_space<vmem>>, %arg2: memref<16x32xf32, #tpu.memory_space<vmem>>, %arg3: memref<1x32xf32, #tpu.memory_space<vmem>>, %arg4: memref<32x4xf32, #tpu.memory_space<vmem>>, %arg5: memref<32x128xf32, #tpu.memory_space<vmem>>, %arg6: memref<4x128xf32, #tpu.memory_space<vmem>>, %arg7: memref<128x4xf32, #tpu.memory_space<vmem>>, %arg8: memref<4x32xf32, #tpu.memory_space<vmem>>, %arg9: memref<128x32xf32, #tpu.memory_space<vmem>>, %arg10: memref<32x4xf32, #tpu.memory_space<vmem>>, %arg11: memref<1x4xf32, #tpu.memory_space<vmem>>, %arg12: memref<4x1xf32, #tpu.memory_space<vmem>>, %arg13: memref<1x4xf32, #tpu.memory_space<vmem>>, %arg14: memref<32x4xf32, #tpu.memory_space<vmem>>) attributes {dimension_semantics = [], scalar_prefetch = 0 : i64, scratch_operands = 0 : i64, tpu.core_type = #tpu.core_type<tc>} {
    %c0 = arith.constant 0 : index
    %c0_0 = arith.constant 0 : index
    %0 = vector.load %arg1[%c0, %c0_0] : memref<32x32xi8, #tpu.memory_space<vmem>>, vector<32x32xi8>
    %1 = arith.sitofp %0 : vector<32x32xi8> to vector<32x32xf32>
    %cst = arith.constant 1.000000e+00 : f32
    %2 = vector.broadcast %cst : f32 to vector<32x32xf32>
    %3 = arith.subf %1, %2 : vector<32x32xf32>
    %cst_1 = arith.constant 1.000000e+30 : f32
    %4 = vector.broadcast %cst_1 : f32 to vector<32x32xf32>
    %5 = arith.mulf %3, %4 : vector<32x32xf32>
    %c0_2 = arith.constant 0 : index
    %c0_3 = arith.constant 0 : index
    %6 = vector.load %arg0[%c0_2, %c0_3] : memref<32x16xf32, #tpu.memory_space<vmem>>, vector<32x16xf32>
    %7 = arith.truncf %6 : vector<32x16xf32> to vector<32x16xbf16>
    %c0_4 = arith.constant 0 : index
    %c0_5 = arith.constant 0 : index
    %8 = vector.load %arg2[%c0_4, %c0_5] : memref<16x32xf32, #tpu.memory_space<vmem>>, vector<16x32xf32>
    %9 = arith.truncf %8 : vector<16x32xf32> to vector<16x32xbf16>
    %cst_6 = arith.constant dense<0.000000e+00> : vector<32x32xf32>
    %10 = tpu.matmul %7, %9, %cst_6 {dimension_numbers = #tpu.dot_dimension_numbers<[1], [0], [0], [1], [0, 0, 1, 1], [], []>} : vector<32x16xbf16>, vector<16x32xbf16>, vector<32x32xf32> -> vector<32x32xf32>
    %c0_7 = arith.constant 0 : index
    %c0_8 = arith.constant 0 : index
    %11 = vector.load %arg3[%c0_7, %c0_8] : memref<1x32xf32, #tpu.memory_space<vmem>>, vector<1x32xf32>
    %12 = vector.broadcast %11 : vector<1x32xf32> to vector<32x32xf32>
    %13 = arith.addf %10, %12 : vector<32x32xf32>
    %c0_9 = arith.constant 0 : index
    %c0_10 = arith.constant 0 : index
    %14 = vector.load %arg5[%c0_9, %c0_10] : memref<32x128xf32, #tpu.memory_space<vmem>>, vector<32x128xf32>
    %cst_11 = arith.constant dense<0.000000e+00> : vector<32x128xf32>
    %15 = tpu.matmul %13, %14, %cst_11 {dimension_numbers = #tpu.dot_dimension_numbers<[1], [0], [0], [1], [0, 0, 1, 1], [], []>} : vector<32x32xf32>, vector<32x128xf32>, vector<32x128xf32> -> vector<32x128xf32>
    %c0_12 = arith.constant 0 : index
    %c0_13 = arith.constant 0 : index
    %16 = vector.load %arg4[%c0_12, %c0_13] : memref<32x4xf32, #tpu.memory_space<vmem>>, vector<32x4xf32>
    %cst_14 = arith.constant dense<0.000000e+00> : vector<32x4xf32>
    %17 = tpu.matmul %13, %16, %cst_14 {dimension_numbers = #tpu.dot_dimension_numbers<[1], [0], [0], [1], [0, 0, 1, 1], [], []>} : vector<32x32xf32>, vector<32x4xf32>, vector<32x4xf32> -> vector<32x4xf32>
    %18 = tpu.transpose %17, [1, 0] : vector<32x4xf32> -> vector<4x32xf32>
    %19 = vector.extract_strided_slice %18 {offsets = [0, 0], sizes = [1, 32], strides = [1, 1]} : vector<4x32xf32> to vector<1x32xf32>
    %20 = vector.extract_strided_slice %18 {offsets = [1, 0], sizes = [1, 32], strides = [1, 1]} : vector<4x32xf32> to vector<1x32xf32>
    %21 = vector.extract_strided_slice %18 {offsets = [2, 0], sizes = [1, 32], strides = [1, 1]} : vector<4x32xf32> to vector<1x32xf32>
    %22 = vector.extract_strided_slice %18 {offsets = [3, 0], sizes = [1, 32], strides = [1, 1]} : vector<4x32xf32> to vector<1x32xf32>
    %23 = tpu.concatenate %19, %20, %21, %22 in 1 : vector<1x32xf32>, vector<1x32xf32>, vector<1x32xf32>, vector<1x32xf32> -> vector<1x128xf32>
    %24 = tpu.concatenate %5, %5, %5, %5 in 1 : vector<32x32xf32>, vector<32x32xf32>, vector<32x32xf32>, vector<32x32xf32> -> vector<32x128xf32>
    %25 = tpu.concatenate %1, %1, %1, %1 in 1 : vector<32x32xf32>, vector<32x32xf32>, vector<32x32xf32>, vector<32x32xf32> -> vector<32x128xf32>
    %26 = vector.broadcast %23 : vector<1x128xf32> to vector<32x128xf32>
    %27 = arith.addf %15, %26 : vector<32x128xf32>
    %cst_15 = arith.constant 0.000000e+00 : f32
    %28 = vector.broadcast %cst_15 : f32 to vector<32x128xf32>
    %29 = arith.cmpf oge, %27, %28 : vector<32x128xf32>
    %cst_16 = arith.constant 2.000000e-01 : f32
    %30 = vector.broadcast %cst_16 : f32 to vector<32x128xf32>
    %31 = arith.mulf %30, %27 : vector<32x128xf32>
    %32 = arith.select %29, %27, %31 : vector<32x128xi1>, vector<32x128xf32>
    %33 = arith.addf %32, %24 : vector<32x128xf32>
    %34 = vector.extract_strided_slice %33 {offsets = [0, 0], sizes = [32, 32], strides = [1, 1]} : vector<32x128xf32> to vector<32x32xf32>
    %cst_17 = arith.constant dense<0xFF800000> : vector<32xf32>
    %35 = vector.multi_reduction <maximumf>, %34, %cst_17 [1] : vector<32x32xf32> to vector<32xf32>
    %36 = vector.shape_cast %35 : vector<32xf32> to vector<32x1xf32>
    %37 = vector.extract_strided_slice %33 {offsets = [0, 32], sizes = [32, 32], strides = [1, 1]} : vector<32x128xf32> to vector<32x32xf32>
    %cst_18 = arith.constant dense<0xFF800000> : vector<32xf32>
    %38 = vector.multi_reduction <maximumf>, %37, %cst_18 [1] : vector<32x32xf32> to vector<32xf32>
    %39 = vector.shape_cast %38 : vector<32xf32> to vector<32x1xf32>
    %40 = vector.extract_strided_slice %33 {offsets = [0, 64], sizes = [32, 32], strides = [1, 1]} : vector<32x128xf32> to vector<32x32xf32>
    %cst_19 = arith.constant dense<0xFF800000> : vector<32xf32>
    %41 = vector.multi_reduction <maximumf>, %40, %cst_19 [1] : vector<32x32xf32> to vector<32xf32>
    %42 = vector.shape_cast %41 : vector<32xf32> to vector<32x1xf32>
    %43 = vector.extract_strided_slice %33 {offsets = [0, 96], sizes = [32, 32], strides = [1, 1]} : vector<32x128xf32> to vector<32x32xf32>
    %cst_20 = arith.constant dense<0xFF800000> : vector<32xf32>
    %44 = vector.multi_reduction <maximumf>, %43, %cst_20 [1] : vector<32x32xf32> to vector<32xf32>
    %45 = vector.shape_cast %44 : vector<32xf32> to vector<32x1xf32>
    %46 = tpu.concatenate %36, %39, %42, %45 in 1 : vector<32x1xf32>, vector<32x1xf32>, vector<32x1xf32>, vector<32x1xf32> -> vector<32x4xf32>
    %c0_21 = arith.constant 0 : index
    %c0_22 = arith.constant 0 : index
    %47 = vector.load %arg6[%c0_21, %c0_22] : memref<4x128xf32, #tpu.memory_space<vmem>>, vector<4x128xf32>
    %cst_23 = arith.constant dense<0.000000e+00> : vector<32x128xf32>
    %48 = tpu.matmul %46, %47, %cst_23 {dimension_numbers = #tpu.dot_dimension_numbers<[1], [0], [0], [1], [0, 0, 1, 1], [], []>} : vector<32x4xf32>, vector<4x128xf32>, vector<32x128xf32> -> vector<32x128xf32>
    %49 = arith.subf %33, %48 : vector<32x128xf32>
    %50 = math.exp %49 : vector<32x128xf32>
    %51 = arith.mulf %50, %25 : vector<32x128xf32>
    %c0_24 = arith.constant 0 : index
    %c0_25 = arith.constant 0 : index
    %52 = vector.load %arg7[%c0_24, %c0_25] : memref<128x4xf32, #tpu.memory_space<vmem>>, vector<128x4xf32>
    %cst_26 = arith.constant dense<0.000000e+00> : vector<32x4xf32>
    %53 = tpu.matmul %51, %52, %cst_26 {dimension_numbers = #tpu.dot_dimension_numbers<[1], [0], [0], [1], [0, 0, 1, 1], [], []>} : vector<32x128xf32>, vector<128x4xf32>, vector<32x4xf32> -> vector<32x4xf32>
    %54 = tpu.concatenate %13, %13, %13, %13 in 0 : vector<32x32xf32>, vector<32x32xf32>, vector<32x32xf32>, vector<32x32xf32> -> vector<128x32xf32>
    %c0_27 = arith.constant 0 : index
    %c0_28 = arith.constant 0 : index
    %55 = vector.load %arg9[%c0_27, %c0_28] : memref<128x32xf32, #tpu.memory_space<vmem>>, vector<128x32xf32>
    %56 = arith.mulf %54, %55 : vector<128x32xf32>
    %57 = arith.truncf %56 : vector<128x32xf32> to vector<128x32xbf16>
    %58 = arith.truncf %51 : vector<32x128xf32> to vector<32x128xbf16>
    %cst_29 = arith.constant dense<0.000000e+00> : vector<32x32xf32>
    %59 = tpu.matmul %58, %57, %cst_29 {dimension_numbers = #tpu.dot_dimension_numbers<[1], [0], [0], [1], [0, 0, 1, 1], [], []>} : vector<32x128xbf16>, vector<128x32xbf16>, vector<32x32xf32> -> vector<32x32xf32>
    %cst_30 = arith.constant 9.99999968E-21 : f32
    %60 = vector.broadcast %cst_30 : f32 to vector<32x4xf32>
    %61 = arith.maximumf %53, %60 : vector<32x4xf32>
    %62 = tpu.reciprocal %61 {approx = true} : vector<32x4xf32> -> vector<32x4xf32>
    %c0_31 = arith.constant 0 : index
    %c0_32 = arith.constant 0 : index
    %63 = vector.load %arg8[%c0_31, %c0_32] : memref<4x32xf32, #tpu.memory_space<vmem>>, vector<4x32xf32>
    %cst_33 = arith.constant dense<0.000000e+00> : vector<32x32xf32>
    %64 = tpu.matmul %62, %63, %cst_33 {dimension_numbers = #tpu.dot_dimension_numbers<[1], [0], [0], [1], [0, 0, 1, 1], [], []>} : vector<32x4xf32>, vector<4x32xf32>, vector<32x32xf32> -> vector<32x32xf32>
    %65 = arith.mulf %59, %64 : vector<32x32xf32>
    %cst_34 = arith.constant 0.000000e+00 : f32
    %66 = vector.broadcast %cst_34 : f32 to vector<32x32xf32>
    %67 = arith.cmpf ogt, %65, %66 : vector<32x32xf32>
    %cst_35 = arith.constant 0.000000e+00 : f32
    %68 = vector.broadcast %cst_35 : f32 to vector<32x32xf32>
    %69 = arith.minimumf %65, %68 : vector<32x32xf32>
    %70 = math.exp %69 : vector<32x32xf32>
    %cst_36 = arith.constant 1.000000e+00 : f32
    %71 = vector.broadcast %cst_36 : f32 to vector<32x32xf32>
    %72 = arith.subf %70, %71 : vector<32x32xf32>
    %73 = arith.select %67, %65, %72 : vector<32x32xi1>, vector<32x32xf32>
    %74 = arith.truncf %73 : vector<32x32xf32> to vector<32x32xbf16>
    %c0_37 = arith.constant 0 : index
    %c0_38 = arith.constant 0 : index
    %75 = vector.load %arg10[%c0_37, %c0_38] : memref<32x4xf32, #tpu.memory_space<vmem>>, vector<32x4xf32>
    %76 = arith.truncf %75 : vector<32x4xf32> to vector<32x4xbf16>
    %cst_39 = arith.constant dense<0.000000e+00> : vector<32x4xf32>
    %77 = tpu.matmul %74, %76, %cst_39 {dimension_numbers = #tpu.dot_dimension_numbers<[1], [0], [0], [1], [0, 0, 1, 1], [], []>} : vector<32x32xbf16>, vector<32x4xbf16>, vector<32x4xf32> -> vector<32x4xf32>
    %c0_40 = arith.constant 0 : index
    %c0_41 = arith.constant 0 : index
    %78 = vector.load %arg11[%c0_40, %c0_41] : memref<1x4xf32, #tpu.memory_space<vmem>>, vector<1x4xf32>
    %79 = vector.broadcast %78 : vector<1x4xf32> to vector<32x4xf32>
    %80 = arith.addf %77, %79 : vector<32x4xf32>
    %81 = tpu.transpose %80, [1, 0] : vector<32x4xf32> -> vector<4x32xf32>
    %c0_42 = arith.constant 0 : index
    %c0_43 = arith.constant 0 : index
    %82 = vector.load %arg12[%c0_42, %c0_43] : memref<4x1xf32, #tpu.memory_space<vmem>>, vector<4x1xf32>
    %83 = vector.broadcast %82 : vector<4x1xf32> to vector<4x32xf32>
    %84 = arith.mulf %81, %83 : vector<4x32xf32>
    %cst_44 = arith.constant dense<0.000000e+00> : vector<32xf32>
    %85 = vector.multi_reduction <add>, %84, %cst_44 [0] : vector<4x32xf32> to vector<32xf32>
    %86 = vector.shape_cast %85 : vector<32xf32> to vector<1x32xf32>
    %c0_45 = arith.constant 0 : index
    %c0_46 = arith.constant 0 : index
    %87 = vector.load %arg13[%c0_45, %c0_46] : memref<1x4xf32, #tpu.memory_space<vmem>>, vector<1x4xf32>
    %88 = vector.broadcast %87 : vector<1x4xf32> to vector<32x4xf32>
    %89 = arith.mulf %80, %88 : vector<32x4xf32>
    %cst_47 = arith.constant dense<0.000000e+00> : vector<32xf32>
    %90 = vector.multi_reduction <add>, %89, %cst_47 [1] : vector<32x4xf32> to vector<32xf32>
    %91 = vector.shape_cast %90 : vector<32xf32> to vector<32x1xf32>
    %92 = vector.broadcast %91 : vector<32x1xf32> to vector<32x32xf32>
    %93 = vector.broadcast %86 : vector<1x32xf32> to vector<32x32xf32>
    %94 = arith.addf %92, %93 : vector<32x32xf32>
    %cst_48 = arith.constant 0.000000e+00 : f32
    %95 = vector.broadcast %cst_48 : f32 to vector<32x32xf32>
    %96 = arith.cmpf oge, %94, %95 : vector<32x32xf32>
    %cst_49 = arith.constant 2.000000e-01 : f32
    %97 = vector.broadcast %cst_49 : f32 to vector<32x32xf32>
    %98 = arith.mulf %97, %94 : vector<32x32xf32>
    %99 = arith.select %96, %94, %98 : vector<32x32xi1>, vector<32x32xf32>
    %100 = arith.addf %99, %5 : vector<32x32xf32>
    %cst_50 = arith.constant dense<0xFF800000> : vector<32xf32>
    %101 = vector.multi_reduction <maximumf>, %100, %cst_50 [1] : vector<32x32xf32> to vector<32xf32>
    %102 = vector.shape_cast %101 : vector<32xf32> to vector<32x1xf32>
    %103 = vector.broadcast %102 : vector<32x1xf32> to vector<32x32xf32>
    %104 = arith.subf %100, %103 : vector<32x32xf32>
    %105 = math.exp %104 : vector<32x32xf32>
    %106 = arith.mulf %105, %1 : vector<32x32xf32>
    %cst_51 = arith.constant dense<0.000000e+00> : vector<32xf32>
    %107 = vector.multi_reduction <add>, %106, %cst_51 [1] : vector<32x32xf32> to vector<32xf32>
    %108 = vector.shape_cast %107 : vector<32xf32> to vector<32x1xf32>
    %109 = arith.truncf %106 : vector<32x32xf32> to vector<32x32xbf16>
    %110 = arith.truncf %80 : vector<32x4xf32> to vector<32x4xbf16>
    %cst_52 = arith.constant dense<0.000000e+00> : vector<32x4xf32>
    %111 = tpu.matmul %109, %110, %cst_52 {dimension_numbers = #tpu.dot_dimension_numbers<[1], [0], [0], [1], [0, 0, 1, 1], [], []>} : vector<32x32xbf16>, vector<32x4xbf16>, vector<32x4xf32> -> vector<32x4xf32>
    %cst_53 = arith.constant 9.99999968E-21 : f32
    %112 = vector.broadcast %cst_53 : f32 to vector<32x1xf32>
    %113 = arith.maximumf %108, %112 : vector<32x1xf32>
    %114 = tpu.reciprocal %113 {approx = true} : vector<32x1xf32> -> vector<32x1xf32>
    %115 = vector.broadcast %114 : vector<32x1xf32> to vector<32x4xf32>
    %116 = arith.mulf %111, %115 : vector<32x4xf32>
    %cst_54 = arith.constant 0.000000e+00 : f32
    %117 = vector.broadcast %cst_54 : f32 to vector<32x4xf32>
    %118 = arith.cmpf ogt, %116, %117 : vector<32x4xf32>
    %cst_55 = arith.constant 0.000000e+00 : f32
    %119 = vector.broadcast %cst_55 : f32 to vector<32x4xf32>
    %120 = arith.minimumf %116, %119 : vector<32x4xf32>
    %121 = math.exp %120 : vector<32x4xf32>
    %cst_56 = arith.constant 1.000000e+00 : f32
    %122 = vector.broadcast %cst_56 : f32 to vector<32x4xf32>
    %123 = arith.subf %121, %122 : vector<32x4xf32>
    %124 = arith.select %118, %116, %123 : vector<32x4xi1>, vector<32x4xf32>
    %c0_57 = arith.constant 0 : index
    %c0_58 = arith.constant 0 : index
    %125 = vector.load %arg14[%c0_57, %c0_58] : memref<32x4xf32, #tpu.memory_space<vmem>>, vector<32x4xf32>
    tpu.vector_store %arg14[%c0_57, %c0_58], %124 {strides = array<i32>} : memref<32x4xf32, #tpu.memory_space<vmem>>, vector<32x4xf32>,
    return
  }
}

</mosaic_0001>

<llo_original>
// kernel: tpu_custom_call.1
$region0: #{tpu_custom_call.1}
  #allocation0 [shape = 'u32[]', space=smem, size = 0x4, offset = 0x4, fixed_abs, tag = 'smem constant byte address 0x4 - core index']
  #allocation1 [shape = 'u32[72,128]{1,0:T(1,128)}', space=vmem, size = 0x9000, scoped, tag = 'internal scratch']
  %s0 = inlined_call_operand.vmem [shape: f32[32,16], index: 0, kind: input, shape index: {}]
  %s1 = inlined_call_operand.vmem [shape: s8[32,32], index: 1, kind: input, shape index: {}]
  %s2 = inlined_call_operand.vmem [shape: f32[16,32], index: 2, kind: input, shape index: {}]
  %s3 = inlined_call_operand.vmem [shape: f32[1,32], index: 3, kind: input, shape index: {}]
  %s4 = inlined_call_operand.vmem [shape: f32[32,4], index: 4, kind: input, shape index: {}]
  %s5 = inlined_call_operand.vmem [shape: f32[32,128], index: 5, kind: input, shape index: {}]
  %s6 = inlined_call_operand.vmem [shape: f32[4,128], index: 6, kind: input, shape index: {}]
  %s7 = inlined_call_operand.vmem [shape: f32[128,4], index: 7, kind: input, shape index: {}]
  %s8 = inlined_call_operand.vmem [shape: f32[4,32], index: 8, kind: input, shape index: {}]
  %s9 = inlined_call_operand.vmem [shape: f32[128,32], index: 9, kind: input, shape index: {}]
  %s10 = inlined_call_operand.vmem [shape: f32[32,4], index: 10, kind: input, shape index: {}]
  %s11 = inlined_call_operand.vmem [shape: f32[1,4], index: 11, kind: input, shape index: {}]
  %s12 = inlined_call_operand.vmem [shape: f32[4,1], index: 12, kind: input, shape index: {}]
  %s13 = inlined_call_operand.vmem [shape: f32[1,4], index: 13, kind: input, shape index: {}]
  %s14 = inlined_call_operand.vmem [shape: f32[32,4], index: 14, kind: output, shape index: {}]
  %s15 = sld [smem:[#allocation0]]
  $region66: #{tpu_custom_call.1} parent=0
    _
  %s17 = ssub.s32 1, %s15
  %s18 = scalar_select 0, %s17, %s15
  // Predicated region
  $region2: #{tpu_custom_call.1} parent=0 // pred_check
    _
  $region3: #{tpu_custom_call.1} parent=0 // pred_check_branch
    %20 = sbr.rel (0) target = $region5
  $region4: #{tpu_custom_call.1} parent=0 // pred_region
    _
  $region5: #{tpu_custom_call.1} parent=0 // pred_fallthru
    _
  // Predicated region
  $region6: #{tpu_custom_call.1} parent=0 // pred_check
    _
  $region7: #{tpu_custom_call.1} parent=0 // pred_check_branch
    %22 = sbr.rel (0) target = $region9
  $region8: #{tpu_custom_call.1} parent=0 // pred_region
    _
  $region9: #{tpu_custom_call.1} parent=0 // pred_fallthru
    _
  // Predicated region
  $region10: #{tpu_custom_call.1} parent=0 // pred_check
    _
  $region11: #{tpu_custom_call.1} parent=0 // pred_check_branch
    %24 = sbr.rel (0) target = $region13
  $region12: #{tpu_custom_call.1} parent=0 // pred_region
    _
  $region13: #{tpu_custom_call.1} parent=0 // pred_fallthru
    _
  // Predicated region
  $region14: #{tpu_custom_call.1} parent=0 // pred_check
    _
  $region15: #{tpu_custom_call.1} parent=0 // pred_check_branch
    %26 = sbr.rel (0) target = $region17
  $region16: #{tpu_custom_call.1} parent=0 // pred_region
    _
  $region17: #{tpu_custom_call.1} parent=0 // pred_fallthru
    _
  // Predicated region
  $region18: #{tpu_custom_call.1} parent=0 // pred_check
    _
  $region19: #{tpu_custom_call.1} parent=0 // pred_check_branch
    %28 = sbr.rel (0) target = $region21
  $region20: #{tpu_custom_call.1} parent=0 // pred_region
    _
  $region21: #{tpu_custom_call.1} parent=0 // pred_fallthru
    _
  // Predicated region
  $region22: #{tpu_custom_call.1} parent=0 // pred_check
    _
  $region23: #{tpu_custom_call.1} parent=0 // pred_check_branch
    %30 = sbr.rel (0) target = $region25
  $region24: #{tpu_custom_call.1} parent=0 // pred_region
    _
  $region25: #{tpu_custom_call.1} parent=0 // pred_fallthru
    _
  // Predicated region
  $region26: #{tpu_custom_call.1} parent=0 // pred_check
    _
  $region27: #{tpu_custom_call.1} parent=0 // pred_check_branch
    %32 = sbr.rel (0) target = $region29
  $region28: #{tpu_custom_call.1} parent=0 // pred_region
    _
  $region29: #{tpu_custom_call.1} parent=0 // pred_fallthru
    _
  // Predicated region
  $region30: #{tpu_custom_call.1} parent=0 // pred_check
    _
  $region31: #{tpu_custom_call.1} parent=0 // pred_check_branch
    %34 = sbr.rel (0) target = $region33
  $region32: #{tpu_custom_call.1} parent=0 // pred_region
    _
  $region33: #{tpu_custom_call.1} parent=0 // pred_fallthru
    _
  // Predicated region
  $region34: #{tpu_custom_call.1} parent=0 // pred_check
    _
  $region35: #{tpu_custom_call.1} parent=0 // pred_check_branch
    %36 = sbr.rel (0) target = $region37
  $region36: #{tpu_custom_call.1} parent=0 // pred_region
    _
  $region37: #{tpu_custom_call.1} parent=0 // pred_fallthru
    _
  // Predicated region
  $region38: #{tpu_custom_call.1} parent=0 // pred_check
    _
  $region39: #{tpu_custom_call.1} parent=0 // pred_check_branch
    %38 = sbr.rel (0) target = $region41
  $region40: #{tpu_custom_call.1} parent=0 // pred_region
    _
  $region41: #{tpu_custom_call.1} parent=0 // pred_fallthru
    _
  // Predicated region
  $region42: #{tpu_custom_call.1} parent=0 // pred_check
    _
  $region43: #{tpu_custom_call.1} parent=0 // pred_check_branch
    %40 = sbr.rel (0) target = $region45
  $region44: #{tpu_custom_call.1} parent=0 // pred_region
    _
  $region45: #{tpu_custom_call.1} parent=0 // pred_fallthru
    _
  // Predicated region
  $region46: #{tpu_custom_call.1} parent=0 // pred_check
    _
  $region47: #{tpu_custom_call.1} parent=0 // pred_check_branch
    %42 = sbr.rel (0) target = $region49
  $region48: #{tpu_custom_call.1} parent=0 // pred_region
    _
  $region49: #{tpu_custom_call.1} parent=0 // pred_fallthru
    _
  // Predicated region
  $region50: #{tpu_custom_call.1} parent=0 // pred_check
    _
  $region51: #{tpu_custom_call.1} parent=0 // pred_check_branch
    %44 = sbr.rel (0) target = $region53
  $region52: #{tpu_custom_call.1} parent=0 // pred_region
    _
  $region53: #{tpu_custom_call.1} parent=0 // pred_fallthru
    _
  // Predicated region
  $region54: #{tpu_custom_call.1} parent=0 // pred_check
    _
  $region55: #{tpu_custom_call.1} parent=0 // pred_check_branch
    %46 = sbr.rel (0) target = $region57
  $region56: #{tpu_custom_call.1} parent=0 // pred_region
    _
  $region57: #{tpu_custom_call.1} parent=0 // pred_fallthru
    _
  %v48 = vld [vmem:[%s1] sm:$0xff]
  %v49 = vunpack.c.0.s8 %v48
  %v50 = vunpack.c.1.s8 %v48
  %v51 = vunpack.c.2.s8 %v48
  %v52 = vunpack.c.3.s8 %v48
  %v53 = vcvt.s32.f32 %v49
  %v54 = vcvt.s32.f32 %v50
  %v55 = vcvt.s32.f32 %v51
  %v56 = vcvt.s32.f32 %v52
  %v57 = vsub.f32 %v53, 1.0
  %v58 = vsub.f32 %v54, 1.0
  %v59 = vsub.f32 %v55, 1.0
  %v60 = vsub.f32 %v56, 1.0
  %v61 = vmul.f32 %v57, 1e+30
  %v62 = vmul.f32 %v58, 1e+30
  %v63 = vmul.f32 %v59, 1e+30
  %v64 = vmul.f32 %v60, 1e+30
  %v65 = vld [vmem:[%s0] sm:$0xff]
  %v66 = vld [vmem:[%s0 + $0x8] sm:$0xff]
  %v67 = vld [vmem:[%s0 + $0x10] sm:$0xff]
  %v68 = vld [vmem:[%s0 + $0x18] sm:$0xff]
  %v69 = vpack.c.bf16 %v66, %v65
  %v70 = vpack.c.bf16 %v68, %v67
  %v71 = vld [vmem:[%s2] sm:$0xff]
  %v72 = vld [vmem:[%s2 + $0x8] sm:$0xff]
  %v73 = vpack.c.bf16 %v72, %v71
  %v74 = vld [vmem:[%s3] sm:$0x1]
  %v76 = vperm.slane %v74, 0
  %vm78 = vcmask 130048
  %v80 = vsel %vm78, %v69, 0
  %v83 = vsel %vm78, %v70, 0
  %85 = vmatpush.bf16.msra.mxu0 0
  %86 = vmatpush.bf16.msra.mxu0 0
  %87 = vmatpush.bf16.msra.mxu0 0
  %88 = vmatpush.bf16.msra.mxu0 0
  %89 = vmatpush.bf16.msra.mxu0 0
  %90 = vmatpush.bf16.msra.mxu0 0
  %91 = vmatpush.bf16.msra.mxu0 0
  %92 = vmatpush.bf16.msra.mxu0 %v73
  %93 = vmatmul.bf16.gmra.mxu0 %v80
  %v94 = vpop.f32.mrf.mxu0
  %v95 = vadd.f32 %v76, %v94
  %v96 = vpop.f32.mrf.mxu0
  %v97 = vadd.f32 %v76, %v96
  %98 = vmatmul.bf16.gmra.mxu0 %v83
  %v99 = vpop.f32.mrf.mxu0
  %v100 = vadd.f32 %v76, %v99
  %v101 = vpop.f32.mrf.mxu0
  %v102 = vadd.f32 %v76, %v101
  %103 = vdwg.mxu0
  %v104 = vld [vmem:[%s5] sm:$0xff]
  %v105 = vld [vmem:[%s5 + $0x8] sm:$0xff]
  %v106 = vld [vmem:[%s5 + $0x10] sm:$0xff]
  %v107 = vld [vmem:[%s5 + $0x18] sm:$0xff]
  %v108 = vld [vmem:[%s4] sm:$0xff]
  %v109 = vld [vmem:[%s4 + $0x8] sm:$0xff]
  %v110 = vld [vmem:[%s4 + $0x10] sm:$0xff]
  %v111 = vld [vmem:[%s4 + $0x18] sm:$0xff]
  %vm112 = vcmask 261120
  %v114 = vsel %vm112, %v95, 0
  %v117 = vsel %vm112, %v97, 0
  %v120 = vsel %vm112, %v100, 0
  %v123 = vsel %vm112, %v102, 0
  %125 = vmatpush.msra.mxu0 0.0
  %126 = vmatpush.msra.mxu0 0.0
  %127 = vmatpush.msra.mxu0 0.0
  %128 = vmatpush.msra.mxu0 0.0
  %129 = vmatpush.msra.mxu0 0.0
  %130 = vmatpush.msra.mxu0 0.0
  %131 = vmatpush.msra.mxu0 0.0
  %132 = vmatpush.msra.mxu0 0.0
  %133 = vmatpush.msra.mxu0 0.0
  %134 = vmatpush.msra.mxu0 0.0
  %135 = vmatpush.msra.mxu0 0.0
  %136 = vmatpush.msra.mxu0 0.0
  %137 = vmatpush.msra.mxu0 %v111
  %138 = vmatpush.msra.mxu0 %v110
  %139 = vmatpush.msra.mxu0 %v109
  %140 = vmatpush.msra.mxu0 %v108
  %141 = vmatmul.f32.gmra.mxu0 %v114
  %v142 = vpop.f32.mrf.mxu0
  %v143 = vadd.f32 0.0, %v142
  %144 = vmatmul.f32.gmra.mxu0 %v117
  %v145 = vpop.f32.mrf.mxu0
  %v146 = vadd.f32 0.0, %v145
  %147 = vmatmul.f32.gmra.mxu0 %v120
  %v148 = vpop.f32.mrf.mxu0
  %v149 = vadd.f32 0.0, %v148
  %150 = vmatmul.f32.gmra.mxu0 %v123
  %v151 = vpop.f32.mrf.mxu0
  %v152 = vadd.f32 0.0, %v151
  %153 = vdwg.mxu0
  %154 = vxpose.xlu0.b32.start [1/16] %v143, 128
  %155 = vxpose.xlu0.b32.cont [2/16] %v146, 128
  %156 = vxpose.xlu0.b32.cont [3/16] %v149, 128
  %157 = vxpose.xlu0.b32.cont [4/16] %v152, 128
  %158 = vxpose.xlu0.b32.cont [5/16] 0.0, 128
  %159 = vxpose.xlu0.b32.cont [6/16] 0.0, 128
  %160 = vxpose.xlu0.b32.cont [7/16] 0.0, 128
  %161 = vxpose.xlu0.b32.cont [8/16] 0.0, 128
  %162 = vxpose.xlu0.b32.cont [9/16] 0.0, 128
  %163 = vxpose.xlu0.b32.cont [10/16] 0.0, 128
  %164 = vxpose.xlu0.b32.cont [11/16] 0.0, 128
  %165 = vxpose.xlu0.b32.cont [12/16] 0.0, 128
  %166 = vxpose.xlu0.b32.cont [13/16] 0.0, 128
  %167 = vxpose.xlu0.b32.cont [14/16] 0.0, 128
  %168 = vxpose.xlu0.b32.cont [15/16] 0.0, 128
  %169 = vxpose.xlu0.b32.end [16/16] 0.0, 128
  %v170 = vpop.trf.xlu0
  %v171 = vpop.trf.xlu0
  %v172 = vpop.trf.xlu0
  %v173 = vpop.trf.xlu0
  %v174 = vpop.trf.xlu0
  %v175 = vpop.trf.xlu0
  %v176 = vpop.trf.xlu0
  %v177 = vpop.trf.xlu0
  %v178 = vpop.trf.xlu0
  %v179 = vpop.trf.xlu0
  %v180 = vpop.trf.xlu0
  %v181 = vpop.trf.xlu0
  %v182 = vpop.trf.xlu0
  %v183 = vpop.trf.xlu0
  %v184 = vpop.trf.xlu0
  %v185 = vpop.trf.xlu0
  %v187 = vrot.slane %v170, 1
  %188 = vrot.lane.b32.xlu0 %v187, 32
  %v189 = vpop.permute.xlu0 %188
  %v191 = vrot.slane %v170, 2
  %192 = vrot.lane.b32.xlu0 %v191, 64
  %v193 = vpop.permute.xlu0 %192
  %v195 = vrot.slane %v170, 3
  %196 = vrot.lane.b32.xlu0 %v195, 96
  %v197 = vpop.permute.xlu0 %196
  %v199 = vsel %vm112, %v170, %v189
  %vm200 = vcmask 523264
  %v201 = vsel %vm200, %v199, %v193
  %vm202 = vcmask 785408
  %v203 = vsel %vm202, %v201, %v197
  %208 = vrot.lane.b32.xlu0 %v61, 32
  %v209 = vpop.permute.xlu0 %208
  %210 = vrot.lane.b32.xlu0 %v62, 32
  %v211 = vpop.permute.xlu0 %210
  %212 = vrot.lane.b32.xlu0 %v63, 32
  %v213 = vpop.permute.xlu0 %212
  %214 = vrot.lane.b32.xlu0 %v64, 32
  %v215 = vpop.permute.xlu0 %214
  %220 = vrot.lane.b32.xlu0 %v61, 64
  %v221 = vpop.permute.xlu0 %220
  %222 = vrot.lane.b32.xlu0 %v62, 64
  %v223 = vpop.permute.xlu0 %222
  %224 = vrot.lane.b32.xlu0 %v63, 64
  %v225 = vpop.permute.xlu0 %224
  %226 = vrot.lane.b32.xlu0 %v64, 64
  %v227 = vpop.permute.xlu0 %226
  %232 = vrot.lane.b32.xlu0 %v61, 96
  %v233 = vpop.permute.xlu0 %232
  %234 = vrot.lane.b32.xlu0 %v62, 96
  %v235 = vpop.permute.xlu0 %234
  %236 = vrot.lane.b32.xlu0 %v63, 96
  %v237 = vpop.permute.xlu0 %236
  %238 = vrot.lane.b32.xlu0 %v64, 96
  %v239 = vpop.permute.xlu0 %238
  %v244 = vsel %vm112, %v61, %v209
  %v245 = vsel %vm112, %v62, %v211
  %v246 = vsel %vm112, %v63, %v213
  %v247 = vsel %vm112, %v64, %v215
  %v248 = vsel %vm200, %v244, %v221
  %v249 = vsel %vm200, %v245, %v223
  %v250 = vsel %vm200, %v246, %v225
  %v251 = vsel %vm200, %v247, %v227
  %v252 = vsel %vm202, %v248, %v233
  %v253 = vsel %vm202, %v249, %v235
  %v254 = vsel %vm202, %v250, %v237
  %v255 = vsel %vm202, %v251, %v239
  %260 = vrot.lane.b32.xlu0 %v53, 32
  %v261 = vpop.permute.xlu0 %260
  %262 = vrot.lane.b32.xlu0 %v54, 32
  %v263 = vpop.permute.xlu0 %262
  %264 = vrot.lane.b32.xlu0 %v55, 32
  %v265 = vpop.permute.xlu0 %264
  %266 = vrot.lane.b32.xlu0 %v56, 32
  %v267 = vpop.permute.xlu0 %266
  %272 = vrot.lane.b32.xlu0 %v53, 64
  %v273 = vpop.permute.xlu0 %272
  %274 = vrot.lane.b32.xlu0 %v54, 64
  %v275 = vpop.permute.xlu0 %274
  %276 = vrot.lane.b32.xlu0 %v55, 64
  %v277 = vpop.permute.xlu0 %276
  %278 = vrot.lane.b32.xlu0 %v56, 64
  %v279 = vpop.permute.xlu0 %278
  %284 = vrot.lane.b32.xlu0 %v53, 96
  %v285 = vpop.permute.xlu0 %284
  %286 = vrot.lane.b32.xlu0 %v54, 96
  %v287 = vpop.permute.xlu0 %286
  %288 = vrot.lane.b32.xlu0 %v55, 96
  %v289 = vpop.permute.xlu0 %288
  %290 = vrot.lane.b32.xlu0 %v56, 96
  %v291 = vpop.permute.xlu0 %290
  %v296 = vsel %vm112, %v53, %v261
  %v297 = vsel %vm112, %v54, %v263
  %v298 = vsel %vm112, %v55, %v265
  %v299 = vsel %vm112, %v56, %v267
  %v300 = vsel %vm200, %v296, %v273
  %v301 = vsel %vm200, %v297, %v275
  %v302 = vsel %vm200, %v298, %v277
  %v303 = vsel %vm200, %v299, %v279
  %v304 = vsel %vm202, %v300, %v285
  %v305 = vsel %vm202, %v301, %v287
  %v306 = vsel %vm202, %v302, %v289
  %v307 = vsel %vm202, %v303, %v291
  %v308 = vperm.slane %v203, 0
  %309 = vmatpush.msra.mxu0 0.0
  %310 = vmatpush.msra.mxu0 0.0
  %311 = vmatpush.msra.mxu0 0.0
  %312 = vmatpush.msra.mxu0 0.0
  %313 = vmatpush.msra.mxu0 0.0
  %314 = vmatpush.msra.mxu0 0.0
  %315 = vmatpush.msra.mxu0 0.0
  %316 = vmatpush.msra.mxu0 0.0
  %317 = vmatpush.msra.mxu0 0.0
  %318 = vmatpush.msra.mxu0 0.0
  %319 = vmatpush.msra.mxu0 0.0
  %320 = vmatpush.msra.mxu0 0.0
  %321 = vmatpush.msra.mxu0 %v107
  %322 = vmatpush.msra.mxu0 %v106
  %323 = vmatpush.msra.mxu0 %v105
  %324 = vmatpush.msra.mxu0 %v104
  %325 = vmatmul.f32.gmra.mxu0 %v114
  %v326 = vpop.f32.mrf.mxu0
  %v327 = vadd.f32 %v308, %v326
  %328 = vmatmul.f32.gmra.mxu0 %v117
  %v329 = vpop.f32.mrf.mxu0
  %v330 = vadd.f32 %v308, %v329
  %331 = vmatmul.f32.gmra.mxu0 %v120
  %v332 = vpop.f32.mrf.mxu0
  %v333 = vadd.f32 %v308, %v332
  %334 = vmatmul.f32.gmra.mxu0 %v123
  %v335 = vpop.f32.mrf.mxu0
  %v336 = vadd.f32 %v308, %v335
  %337 = vdwg.mxu0
  %vm338 = vcmp.ge.f32.partialorder %v327, 0.0
  %vm339 = vcmp.ge.f32.partialorder %v330, 0.0
  %vm340 = vcmp.ge.f32.partialorder %v333, 0.0
  %vm341 = vcmp.ge.f32.partialorder %v336, 0.0
  %v342 = vmul.f32 %v327, 0.2
  %v343 = vmul.f32 %v330, 0.2
  %v344 = vmul.f32 %v333, 0.2
  %v345 = vmul.f32 %v336, 0.2
  %v346 = vsel %vm338, %v327, %v342
  %v347 = vsel %vm339, %v330, %v343
  %v348 = vsel %vm340, %v333, %v344
  %v349 = vsel %vm341, %v336, %v345
  %v350 = vadd.f32 %v346, %v252
  %v351 = vadd.f32 %v347, %v253
  %v352 = vadd.f32 %v348, %v254
  %v353 = vadd.f32 %v349, %v255
  %v354 = vsel %vm112, %v350, -inf
  %355 = vmax.xlane.f32.xlu0 %v354
  %v356 = vpop.xlane.xlu0 %355
  %v357 = vsel %vm112, %v351, -inf
  %358 = vmax.xlane.f32.xlu0 %v357
  %v359 = vpop.xlane.xlu0 %358
  %v360 = vsel %vm112, %v352, -inf
  %361 = vmax.xlane.f32.xlu0 %v360
  %v362 = vpop.xlane.xlu0 %361
  %v363 = vsel %vm112, %v353, -inf
  %364 = vmax.xlane.f32.xlu0 %v363
  %v365 = vpop.xlane.xlu0 %364
  %vm366 = vcmask 523520
  %v367 = vsel %vm366, %v350, -inf
  %368 = vmax.xlane.f32.xlu0 %v367
  %v369 = vpop.xlane.xlu0 %368
  %v370 = vsel %vm366, %v351, -inf
  %371 = vmax.xlane.f32.xlu0 %v370
  %v372 = vpop.xlane.xlu0 %371
  %v373 = vsel %vm366, %v352, -inf
  %374 = vmax.xlane.f32.xlu0 %v373
  %v375 = vpop.xlane.xlu0 %374
  %v376 = vsel %vm366, %v353, -inf
  %377 = vmax.xlane.f32.xlu0 %v376
  %v378 = vpop.xlane.xlu0 %377
  %vm379 = vcmask 785920
  %v380 = vsel %vm379, %v350, -inf
  %381 = vmax.xlane.f32.xlu0 %v380
  %v382 = vpop.xlane.xlu0 %381
  %v383 = vsel %vm379, %v351, -inf
  %384 = vmax.xlane.f32.xlu0 %v383
  %v385 = vpop.xlane.xlu0 %384
  %v386 = vsel %vm379, %v352, -inf
  %387 = vmax.xlane.f32.xlu0 %v386
  %v388 = vpop.xlane.xlu0 %387
  %v389 = vsel %vm379, %v353, -inf
  %390 = vmax.xlane.f32.xlu0 %v389
  %v391 = vpop.xlane.xlu0 %390
  %vm392 = vcmask 1048320
  %v393 = vsel %vm392, %v350, -inf
  %394 = vmax.xlane.f32.xlu0 %v393
  %v395 = vpop.xlane.xlu0 %394
  %v396 = vsel %vm392, %v351, -inf
  %397 = vmax.xlane.f32.xlu0 %v396
  %v398 = vpop.xlane.xlu0 %397
  %v399 = vsel %vm392, %v352, -inf
  %400 = vmax.xlane.f32.xlu0 %v399
  %v401 = vpop.xlane.xlu0 %400
  %v402 = vsel %vm392, %v353, -inf
  %403 = vmax.xlane.f32.xlu0 %v402
  %v404 = vpop.xlane.xlu0 %403
  %vm405 = vcmask 7168
  %v406 = vsel %vm405, %v356, %v369
  %v407 = vsel %vm405, %v359, %v372
  %v408 = vsel %vm405, %v362, %v375
  %v409 = vsel %vm405, %v365, %v378
  %vm410 = vcmask 15360
  %v411 = vsel %vm410, %v406, %v382
  %v412 = vsel %vm410, %v407, %v385
  %v413 = vsel %vm410, %v408, %v388
  %v414 = vsel %vm410, %v409, %v391
  %vm415 = vcmask 23552
  %v416 = vsel %vm415, %v411, %v395
  %v417 = vsel %vm415, %v412, %v398
  %v418 = vsel %vm415, %v413, %v401
  %v419 = vsel %vm415, %v414, %v404
  %v420 = vld [vmem:[%s6] sm:$0xf]
  %vm421 = vcmask 31744
  %v423 = vsel %vm421, %v416, 0
  %v426 = vsel %vm421, %v417, 0
  %v429 = vsel %vm421, %v418, 0
  %v432 = vsel %vm421, %v419, 0
  %vm434 = vcmask 1043456
  %v436 = vsel %vm434, %v420, 0
  %438 = vmatpush.msra.mxu0 0.0
  %439 = vmatpush.msra.mxu0 0.0
  %440 = vmatpush.msra.mxu0 0.0
  %441 = vmatpush.msra.mxu0 0.0
  %442 = vmatpush.msra.mxu0 0.0
  %443 = vmatpush.msra.mxu0 0.0
  %444 = vmatpush.msra.mxu0 0.0
  %445 = vmatpush.msra.mxu0 0.0
  %446 = vmatpush.msra.mxu0 0.0
  %447 = vmatpush.msra.mxu0 0.0
  %448 = vmatpush.msra.mxu0 0.0
  %449 = vmatpush.msra.mxu0 0.0
  %450 = vmatpush.msra.mxu0 0.0
  %451 = vmatpush.msra.mxu0 0.0
  %452 = vmatpush.msra.mxu0 0.0
  %453 = vmatpush.msra.mxu0 %v436
  %454 = vmatmul.f32.gmra.mxu0 %v423
  %v455 = vpop.f32.mrf.mxu0
  %v456 = vadd.f32 0.0, %v455
  %457 = vmatmul.f32.gmra.mxu0 %v426
  %v458 = vpop.f32.mrf.mxu0
  %v459 = vadd.f32 0.0, %v458
  %460 = vmatmul.f32.gmra.mxu0 %v429
  %v461 = vpop.f32.mrf.mxu0
  %v462 = vadd.f32 0.0, %v461
  %463 = vmatmul.f32.gmra.mxu0 %v432
  %v464 = vpop.f32.mrf.mxu0
  %v465 = vadd.f32 0.0, %v464
  %466 = vdwg.mxu0
  %v467 = vsub.f32 %v350, %v456
  %v468 = vsub.f32 %v351, %v459
  %v469 = vsub.f32 %v352, %v462
  %v470 = vsub.f32 %v353, %v465
  %v471 = vmul.f32 %v467, 1.442695
  %v472 = vpow.pop %v471
  %v473 = vmul.f32 %v468, 1.442695
  %v474 = vpow.pop %v473
  %v475 = vmul.f32 %v469, 1.442695
  %v476 = vpow.pop %v475
  %v477 = vmul.f32 %v470, 1.442695
  %v478 = vpow.pop %v477
  %v479 = vmul.f32 %v472, %v304
  %v480 = vmul.f32 %v474, %v305
  %v481 = vmul.f32 %v476, %v306
  %v482 = vmul.f32 %v478, %v307
  %v483 = vld [vmem:[%s7] sm:$0xff]
  %v484 = vld [vmem:[%s7 + $0x8] sm:$0xff]
  %v485 = vld [vmem:[%s7 + $0x10] sm:$0xff]
  %v486 = vld [vmem:[%s7 + $0x18] sm:$0xff]
  %v487 = vld [vmem:[%s7 + $0x20] sm:$0xff]
  %v488 = vld [vmem:[%s7 + $0x28] sm:$0xff]
  %v489 = vld [vmem:[%s7 + $0x30] sm:$0xff]
  %v490 = vld [vmem:[%s7 + $0x38] sm:$0xff]
  %v491 = vld [vmem:[%s7 + $0x40] sm:$0xff]
  %v492 = vld [vmem:[%s7 + $0x48] sm:$0xff]
  %v493 = vld [vmem:[%s7 + $0x50] sm:$0xff]
  %v494 = vld [vmem:[%s7 + $0x58] sm:$0xff]
  %v495 = vld [vmem:[%s7 + $0x60] sm:$0xff]
  %v496 = vld [vmem:[%s7 + $0x68] sm:$0xff]
  %v497 = vld [vmem:[%s7 + $0x70] sm:$0xff]
  %v498 = vld [vmem:[%s7 + $0x78] sm:$0xff]
  %499 = vmatpush.msra.mxu0 %v498
  %500 = vmatpush.msra.mxu0 %v497
  %501 = vmatpush.msra.mxu0 %v496
  %502 = vmatpush.msra.mxu0 %v495
  %503 = vmatpush.msra.mxu0 %v494
  %504 = vmatpush.msra.mxu0 %v493
  %505 = vmatpush.msra.mxu0 %v492
  %506 = vmatpush.msra.mxu0 %v491
  %507 = vmatpush.msra.mxu0 %v490
  %508 = vmatpush.msra.mxu0 %v489
  %509 = vmatpush.msra.mxu0 %v488
  %510 = vmatpush.msra.mxu0 %v487
  %511 = vmatpush.msra.mxu0 %v486
  %512 = vmatpush.msra.mxu0 %v485
  %513 = vmatpush.msra.mxu0 %v484
  %514 = vmatpush.msra.mxu0 %v483
  %515 = vmatmul.f32.gmra.mxu0 %v479
  %v516 = vpop.f32.mrf.mxu0
  %v517 = vadd.f32 0.0, %v516
  %518 = vmatmul.f32.gmra.mxu0 %v480
  %v519 = vpop.f32.mrf.mxu0
  %v520 = vadd.f32 0.0, %v519
  %521 = vmatmul.f32.gmra.mxu0 %v481
  %v522 = vpop.f32.mrf.mxu0
  %v523 = vadd.f32 0.0, %v522
  %524 = vmatmul.f32.gmra.mxu0 %v482
  %v525 = vpop.f32.mrf.mxu0
  %v526 = vadd.f32 0.0, %v525
  %527 = vdwg.mxu0
  %v528 = vld [vmem:[%s9] sm:$0xff]
  %v529 = vld [vmem:[%s9 + $0x8] sm:$0xff]
  %v530 = vld [vmem:[%s9 + $0x10] sm:$0xff]
  %v531 = vld [vmem:[%s9 + $0x18] sm:$0xff]
  %v532 = vld [vmem:[%s9 + $0x20] sm:$0xff]
  %v533 = vld [vmem:[%s9 + $0x28] sm:$0xff]
  %v534 = vld [vmem:[%s9 + $0x30] sm:$0xff]
  %v535 = vld [vmem:[%s9 + $0x38] sm:$0xff]
  %v536 = vld [vmem:[%s9 + $0x40] sm:$0xff]
  %v537 = vld [vmem:[%s9 + $0x48] sm:$0xff]
  %v538 = vld [vmem:[%s9 + $0x50] sm:$0xff]
  %v539 = vld [vmem:[%s9 + $0x58] sm:$0xff]
  %v540 = vld [vmem:[%s9 + $0x60] sm:$0xff]
  %v541 = vld [vmem:[%s9 + $0x68] sm:$0xff]
  %v542 = vld [vmem:[%s9 + $0x70] sm:$0xff]
  %v543 = vld [vmem:[%s9 + $0x78] sm:$0xff]
  %v544 = vmul.f32 %v95, %v528
  %v545 = vmul.f32 %v97, %v529
  %v546 = vmul.f32 %v100, %v530
  %v547 = vmul.f32 %v102, %v531
  %v548 = vmul.f32 %v95, %v532
  %v549 = vmul.f32 %v97, %v533
  %v550 = vmul.f32 %v100, %v534
  %v551 = vmul.f32 %v102, %v535
  %v552 = vmul.f32 %v95, %v536
  %v553 = vmul.f32 %v97, %v537
  %v554 = vmul.f32 %v100, %v538
  %v555 = vmul.f32 %v102, %v539
  %v556 = vmul.f32 %v95, %v540
  %v557 = vmul.f32 %v97, %v541
  %v558 = vmul.f32 %v100, %v542
  %v559 = vmul.f32 %v102, %v543
  %v560 = vpack.c.bf16 %v545, %v544
  %v561 = vpack.c.bf16 %v547, %v546
  %v562 = vpack.c.bf16 %v549, %v548
  %v563 = vpack.c.bf16 %v551, %v550
  %v564 = vpack.c.bf16 %v553, %v552
  %v565 = vpack.c.bf16 %v555, %v554
  %v566 = vpack.c.bf16 %v557, %v556
  %v567 = vpack.c.bf16 %v559, %v558
  %v568 = vpack.c.bf16 %v480, %v479
  %v569 = vpack.c.bf16 %v482, %v481
  %570 = vmatpush.bf16.msra.mxu0 %v567
  %571 = vmatpush.bf16.msra.mxu0 %v566
  %572 = vmatpush.bf16.msra.mxu0 %v565
  %573 = vmatpush.bf16.msra.mxu0 %v564
  %574 = vmatpush.bf16.msra.mxu0 %v563
  %575 = vmatpush.bf16.msra.mxu0 %v562
  %576 = vmatpush.bf16.msra.mxu0 %v561
  %577 = vmatpush.bf16.msra.mxu0 %v560
  %578 = vmatmul.bf16.gmra.mxu0 %v568
  %v579 = vpop.f32.mrf.mxu0
  %v580 = vadd.f32 0.0, %v579
  %v581 = vpop.f32.mrf.mxu0
  %v582 = vadd.f32 0.0, %v581
  %583 = vmatmul.bf16.gmra.mxu0 %v569
  %v584 = vpop.f32.mrf.mxu0
  %v585 = vadd.f32 0.0, %v584
  %v586 = vpop.f32.mrf.mxu0
  %v587 = vadd.f32 0.0, %v586
  %588 = vdwg.mxu0
  %v589 = vmax.f32 %v517, 1e-20
  %v590 = vmax.f32 %v520, 1e-20
  %v591 = vmax.f32 %v523, 1e-20
  %v592 = vmax.f32 %v526, 1e-20
  %v593 = vrcp.pop %v589
  %v594 = vrcp.pop %v590
  %v595 = vrcp.pop %v591
  %v596 = vrcp.pop %v592
  %v597 = vld [vmem:[%s8] sm:$0xf]
  %v599 = vsel %vm421, %v593, 0
  %v602 = vsel %vm421, %v594, 0
  %v605 = vsel %vm421, %v595, 0
  %v608 = vsel %vm421, %v596, 0
  %v611 = vsel %vm434, %v597, 0
  %613 = vmatpush.msra.mxu0 0.0
  %614 = vmatpush.msra.mxu0 0.0
  %615 = vmatpush.msra.mxu0 0.0
  %616 = vmatpush.msra.mxu0 0.0
  %617 = vmatpush.msra.mxu0 0.0
  %618 = vmatpush.msra.mxu0 0.0
  %619 = vmatpush.msra.mxu0 0.0
  %620 = vmatpush.msra.mxu0 0.0
  %621 = vmatpush.msra.mxu0 0.0
  %622 = vmatpush.msra.mxu0 0.0
  %623 = vmatpush.msra.mxu0 0.0
  %624 = vmatpush.msra.mxu0 0.0
  %625 = vmatpush.msra.mxu0 0.0
  %626 = vmatpush.msra.mxu0 0.0
  %627 = vmatpush.msra.mxu0 0.0
  %628 = vmatpush.msra.mxu0 %v611
  %629 = vmatmul.f32.gmra.mxu0 %v599
  %v630 = vpop.f32.mrf.mxu0
  %v631 = vadd.f32 0.0, %v630
  %632 = vmatmul.f32.gmra.mxu0 %v602
  %v633 = vpop.f32.mrf.mxu0
  %v634 = vadd.f32 0.0, %v633
  %635 = vmatmul.f32.gmra.mxu0 %v605
  %v636 = vpop.f32.mrf.mxu0
  %v637 = vadd.f32 0.0, %v636
  %638 = vmatmul.f32.gmra.mxu0 %v608
  %v639 = vpop.f32.mrf.mxu0
  %v640 = vadd.f32 0.0, %v639
  %641 = vdwg.mxu0
  %v642 = vmul.f32 %v580, %v631
  %v643 = vmul.f32 %v582, %v634
  %v644 = vmul.f32 %v585, %v637
  %v645 = vmul.f32 %v587, %v640
  %vm646 = vcmp.gt.f32.partialorder %v642, 0.0
  %vm647 = vcmp.gt.f32.partialorder %v643, 0.0
  %vm648 = vcmp.gt.f32.partialorder %v644, 0.0
  %vm649 = vcmp.gt.f32.partialorder %v645, 0.0
  %v650 = vmin.f32 %v642, 0.0
  %v651 = vmin.f32 %v643, 0.0
  %v652 = vmin.f32 %v644, 0.0
  %v653 = vmin.f32 %v645, 0.0
  %v654 = vmul.f32 %v650, 1.442695
  %v655 = vpow.pop %v654
  %v656 = vmul.f32 %v651, 1.442695
  %v657 = vpow.pop %v656
  %v658 = vmul.f32 %v652, 1.442695
  %v659 = vpow.pop %v658
  %v660 = vmul.f32 %v653, 1.442695
  %v661 = vpow.pop %v660
  %v662 = vsub.f32 %v655, 1.0
  %v663 = vsub.f32 %v657, 1.0
  %v664 = vsub.f32 %v659, 1.0
  %v665 = vsub.f32 %v661, 1.0
  %v666 = vsel %vm646, %v642, %v662
  %v667 = vsel %vm647, %v643, %v663
  %v668 = vsel %vm648, %v644, %v664
  %v669 = vsel %vm649, %v645, %v665
  %v670 = vpack.c.bf16 %v667, %v666
  %v671 = vpack.c.bf16 %v669, %v668
  %v672 = vld [vmem:[%s10] sm:$0xff]
  %v673 = vld [vmem:[%s10 + $0x8] sm:$0xff]
  %v674 = vld [vmem:[%s10 + $0x10] sm:$0xff]
  %v675 = vld [vmem:[%s10 + $0x18] sm:$0xff]
  %v676 = vpack.c.bf16 %v673, %v672
  %v677 = vpack.c.bf16 %v675, %v674
  %v678 = vld [vmem:[%s11] sm:$0x1]
  %v680 = vperm.slane %v678, 0
  %v683 = vsel %vm112, %v670, 0
  %v686 = vsel %vm112, %v671, 0
  %688 = vmatpush.bf16.msra.mxu0 0
  %689 = vmatpush.bf16.msra.mxu0 0
  %690 = vmatpush.bf16.msra.mxu0 0
  %691 = vmatpush.bf16.msra.mxu0 0
  %692 = vmatpush.bf16.msra.mxu0 0
  %693 = vmatpush.bf16.msra.mxu0 0
  %694 = vmatpush.bf16.msra.mxu0 %v677
  %695 = vmatpush.bf16.msra.mxu0 %v676
  %696 = vmatmul.bf16.gmra.mxu0 %v683
  %v697 = vpop.f32.mrf.mxu0
  %v698 = vadd.f32 %v680, %v697
  %v699 = vpop.f32.mrf.mxu0
  %v700 = vadd.f32 %v680, %v699
  %701 = vmatmul.bf16.gmra.mxu0 %v686
  %v702 = vpop.f32.mrf.mxu0
  %v703 = vadd.f32 %v680, %v702
  %v704 = vpop.f32.mrf.mxu0
  %v705 = vadd.f32 %v680, %v704
  %706 = vdwg.mxu0
  %707 = vxpose.xlu0.b32.start [1/16] %v698, 128
  %708 = vxpose.xlu0.b32.cont [2/16] %v700, 128
  %709 = vxpose.xlu0.b32.cont [3/16] %v703, 128
  %710 = vxpose.xlu0.b32.cont [4/16] %v705, 128
  %711 = vxpose.xlu0.b32.cont [5/16] 0.0, 128
  %712 = vxpose.xlu0.b32.cont [6/16] 0.0, 128
  %713 = vxpose.xlu0.b32.cont [7/16] 0.0, 128
  %714 = vxpose.xlu0.b32.cont [8/16] 0.0, 128
  %715 = vxpose.xlu0.b32.cont [9/16] 0.0, 128
  %716 = vxpose.xlu0.b32.cont [10/16] 0.0, 128
  %717 = vxpose.xlu0.b32.cont [11/16] 0.0, 128
  %718 = vxpose.xlu0.b32.cont [12/16] 0.0, 128
  %719 = vxpose.xlu0.b32.cont [13/16] 0.0, 128
  %720 = vxpose.xlu0.b32.cont [14/16] 0.0, 128
  %721 = vxpose.xlu0.b32.cont [15/16] 0.0, 128
  %722 = vxpose.xlu0.b32.end [16/16] 0.0, 128
  %v723 = vpop.trf.xlu0
  %v724 = vpop.trf.xlu0
  %v725 = vpop.trf.xlu0
  %v726 = vpop.trf.xlu0
  %v727 = vpop.trf.xlu0
  %v728 = vpop.trf.xlu0
  %v729 = vpop.trf.xlu0
  %v730 = vpop.trf.xlu0
  %v731 = vpop.trf.xlu0
  %v732 = vpop.trf.xlu0
  %v733 = vpop.trf.xlu0
  %v734 = vpop.trf.xlu0
  %v735 = vpop.trf.xlu0
  %v736 = vpop.trf.xlu0
  %v737 = vpop.trf.xlu0
  %v738 = vpop.trf.xlu0
  %v739 = vld [vmem:[%s12] sm:$0xf]
  %741 = vset.pattern.permute.xlu0 0
  %742 = vperm.xlu0 %741, %v739
  %v743 = vpop.permute.xlu0 %742
  %v745 = vmul.f32 %v723, %v743
  %vm746 = vcmask 257024
  %v747 = vsel %vm746, %v745, 0.0
  %v748 = vrot.slane %v747, 4
  %v749 = vadd.f32 %v747, %v748
  %v750 = vrot.slane %v749, 2
  %v751 = vadd.f32 %v749, %v750
  %v752 = vrot.slane %v751, 1
  %v753 = vadd.f32 %v751, %v752
  %v754 = vld [vmem:[%s13] sm:$0x1]
  %v756 = vperm.slane %v754, 0
  %v758 = vmul.f32 %v698, %v756
  %v759 = vmul.f32 %v700, %v756
  %v760 = vmul.f32 %v703, %v756
  %v761 = vmul.f32 %v705, %v756
  %v762 = vsel %vm421, %v758, 0.0
  %763 = vadd.xlane.f32.xlu0 %v762
  %v764 = vpop.xlane.xlu0 %763
  %v765 = vsel %vm421, %v759, 0.0
  %766 = vadd.xlane.f32.xlu0 %v765
  %v767 = vpop.xlane.xlu0 %766
  %v768 = vsel %vm421, %v760, 0.0
  %769 = vadd.xlane.f32.xlu0 %v768
  %v770 = vpop.xlane.xlu0 %769
  %v771 = vsel %vm421, %v761, 0.0
  %772 = vadd.xlane.f32.xlu0 %v771
  %v773 = vpop.xlane.xlu0 %772
  %v774 = vadd.f32 %v764, %v753
  %v775 = vadd.f32 %v767, %v753
  %v776 = vadd.f32 %v770, %v753
  %v777 = vadd.f32 %v773, %v753
  %vm778 = vcmp.ge.f32.partialorder %v774, 0.0
  %vm779 = vcmp.ge.f32.partialorder %v775, 0.0
  %vm780 = vcmp.ge.f32.partialorder %v776, 0.0
  %vm781 = vcmp.ge.f32.partialorder %v777, 0.0
  %v782 = vmul.f32 %v774, 0.2
  %v783 = vmul.f32 %v775, 0.2
  %v784 = vmul.f32 %v776, 0.2
  %v785 = vmul.f32 %v777, 0.2
  %v786 = vsel %vm778, %v774, %v782
  %v787 = vsel %vm779, %v775, %v783
  %v788 = vsel %vm780, %v776, %v784
  %v789 = vsel %vm781, %v777, %v785
  %v790 = vadd.f32 %v786, %v61
  %v791 = vadd.f32 %v787, %v62
  %v792 = vadd.f32 %v788, %v63
  %v793 = vadd.f32 %v789, %v64
  %v794 = vsel %vm112, %v790, -inf
  %795 = vmax.xlane.f32.xlu0 %v794
  %v796 = vpop.xlane.xlu0 %795
  %v797 = vsel %vm112, %v791, -inf
  %798 = vmax.xlane.f32.xlu0 %v797
  %v799 = vpop.xlane.xlu0 %798
  %v800 = vsel %vm112, %v792, -inf
  %801 = vmax.xlane.f32.xlu0 %v800
  %v802 = vpop.xlane.xlu0 %801
  %v803 = vsel %vm112, %v793, -inf
  %804 = vmax.xlane.f32.xlu0 %v803
  %v805 = vpop.xlane.xlu0 %804
  %v806 = vsub.f32 %v790, %v796
  %v807 = vsub.f32 %v791, %v799
  %v808 = vsub.f32 %v792, %v802
  %v809 = vsub.f32 %v793, %v805
  %v810 = vmul.f32 %v806, 1.442695
  %v811 = vpow.pop %v810
  %v812 = vmul.f32 %v807, 1.442695
  %v813 = vpow.pop %v812
  %v814 = vmul.f32 %v808, 1.442695
  %v815 = vpow.pop %v814
  %v816 = vmul.f32 %v809, 1.442695
  %v817 = vpow.pop %v816
  %v818 = vmul.f32 %v811, %v53
  %v819 = vmul.f32 %v813, %v54
  %v820 = vmul.f32 %v815, %v55
  %v821 = vmul.f32 %v817, %v56
  %v822 = vsel %vm112, %v818, 0.0
  %823 = vadd.xlane.f32.xlu0 %v822
  %v824 = vpop.xlane.xlu0 %823
  %v825 = vsel %vm112, %v819, 0.0
  %826 = vadd.xlane.f32.xlu0 %v825
  %v827 = vpop.xlane.xlu0 %826
  %v828 = vsel %vm112, %v820, 0.0
  %829 = vadd.xlane.f32.xlu0 %v828
  %v830 = vpop.xlane.xlu0 %829
  %v831 = vsel %vm112, %v821, 0.0
  %832 = vadd.xlane.f32.xlu0 %v831
  %v833 = vpop.xlane.xlu0 %832
  %v834 = vpack.c.bf16 %v819, %v818
  %v835 = vpack.c.bf16 %v821, %v820
  %v836 = vpack.c.bf16 %v700, %v698
  %v837 = vpack.c.bf16 %v705, %v703
  %v839 = vsel %vm112, %v834, 0
  %v842 = vsel %vm112, %v835, 0
  %844 = vmatpush.bf16.msra.mxu0 0
  %845 = vmatpush.bf16.msra.mxu0 0
  %846 = vmatpush.bf16.msra.mxu0 0
  %847 = vmatpush.bf16.msra.mxu0 0
  %848 = vmatpush.bf16.msra.mxu0 0
  %849 = vmatpush.bf16.msra.mxu0 0
  %850 = vmatpush.bf16.msra.mxu0 %v837
  %851 = vmatpush.bf16.msra.mxu0 %v836
  %852 = vmatmul.bf16.gmra.mxu0 %v839
  %v853 = vpop.f32.mrf.mxu0
  %v854 = vadd.f32 0.0, %v853
  %v855 = vpop.f32.mrf.mxu0
  %v856 = vadd.f32 0.0, %v855
  %857 = vmatmul.bf16.gmra.mxu0 %v842
  %v858 = vpop.f32.mrf.mxu0
  %v859 = vadd.f32 0.0, %v858
  %v860 = vpop.f32.mrf.mxu0
  %v861 = vadd.f32 0.0, %v860
  %862 = vdwg.mxu0
  %v863 = vmax.f32 %v824, 1e-20
  %v864 = vmax.f32 %v827, 1e-20
  %v865 = vmax.f32 %v830, 1e-20
  %v866 = vmax.f32 %v833, 1e-20
  %v867 = vrcp.pop %v863
  %v868 = vrcp.pop %v864
  %v869 = vrcp.pop %v865
  %v870 = vrcp.pop %v866
  %v871 = vmul.f32 %v854, %v867
  %v872 = vmul.f32 %v856, %v868
  %v873 = vmul.f32 %v859, %v869
  %v874 = vmul.f32 %v861, %v870
  %vm875 = vcmp.gt.f32.partialorder %v871, 0.0
  %vm876 = vcmp.gt.f32.partialorder %v872, 0.0
  %vm877 = vcmp.gt.f32.partialorder %v873, 0.0
  %vm878 = vcmp.gt.f32.partialorder %v874, 0.0
  %v879 = vmin.f32 %v871, 0.0
  %v880 = vmin.f32 %v872, 0.0
  %v881 = vmin.f32 %v873, 0.0
  %v882 = vmin.f32 %v874, 0.0
  %v883 = vmul.f32 %v879, 1.442695
  %v884 = vpow.pop %v883
  %v885 = vmul.f32 %v880, 1.442695
  %v886 = vpow.pop %v885
  %v887 = vmul.f32 %v881, 1.442695
  %v888 = vpow.pop %v887
  %v889 = vmul.f32 %v882, 1.442695
  %v890 = vpow.pop %v889
  %v891 = vsub.f32 %v884, 1.0
  %v892 = vsub.f32 %v886, 1.0
  %v893 = vsub.f32 %v888, 1.0
  %v894 = vsub.f32 %v890, 1.0
  %v895 = vsel %vm875, %v871, %v891
  %v896 = vsel %vm876, %v872, %v892
  %v897 = vsel %vm877, %v873, %v893
  %v898 = vsel %vm878, %v874, %v894
  %899 = vst.msk [vmem:[%s14] sm:$0xff] %vm421, %v895
  %900 = vst.msk [vmem:[%s14 + $0x8] sm:$0xff] %vm421, %v896
  %901 = vst.msk [vmem:[%s14 + $0x10] sm:$0xff] %vm421, %v897
  %902 = vst.msk [vmem:[%s14 + $0x18] sm:$0xff] %vm421, %v898
  // Predicated region
  $region58: #{tpu_custom_call.1} parent=0 // pred_check
    _
  $region59: #{tpu_custom_call.1} parent=0 // pred_check_branch
    %904 = sbr.rel (0) target = $region61
  $region60: #{tpu_custom_call.1} parent=0 // pred_region
    _
  $region61: #{tpu_custom_call.1} parent=0 // pred_fallthru
    _
  // Predicated region
  $region62: #{tpu_custom_call.1} parent=0 // pred_check
    _
  $region63: #{tpu_custom_call.1} parent=0 // pred_check_branch
    %906 = sbr.rel (0) target = $region65
  $region64: #{tpu_custom_call.1} parent=0 // pred_region
    _
  $region65: #{tpu_custom_call.1} parent=0 // pred_fallthru
    _

</llo_original>
